<compile_context>
chip_gen: v5e
topology: v5e:2x2
jax: 0.10.0
libtpu: 0.0.40
codegen_flags: <defaults>
</compile_context>

<pallas_src>
import functools
import math

import jax
import jax.numpy as jnp
from jax.experimental import pallas as pl
from jax.experimental.pallas import tpu as pltpu

# Model hyper-parameters (from the PyTorch module)
EMBEDDING_SIZE = 10
HIDDEN_SIZE = 8
INPUT_SIZE = 4      # vocab size of the Embedding
NUM_CLASS = 4
NUM_LAYERS = 2

H2 = 2 * HIDDEN_SIZE   # width of the fused [h0 | h1] state

# Row layout of the packed parameter slab (width = 2H = 16, f32).
# Every piece starts on an 8-row sublane-tile boundary.
ROW_W16 = 0     # rows  0:16  fused recurrence weight [[Whh0.T, Wih1.T], [0, Whh1.T]]
ROW_ZTBL = 16   # rows 16:20  per-token table: [emb @ Wih0.T + b_ih0 + b_hh0 | b_ih1 + b_hh1]
ROW_FCW = 24    # rows 24:40  fc weight lifted to (2H, C): top H rows zero, bottom H = fc_w.T
ROW_FCB = 40    # row  40     fc bias (1, C)
SLAB_ROWS = 48


def rnn_kernel(idx_ref,     # (T*B, 1) int32 token ids, t-major (row = t*B + b)
               slab_ref,    # (SLAB_ROWS, 2H) f32 packed parameters
               out_ref,     # (T*B, C) f32 logits, t-major
               seq_ref,     # (T*B, 2H) f32 VMEM scratch: per-step fused states
               *, batch, seq_len):
    B, T = batch, seq_len
    H, C, V = HIDDEN_SIZE, NUM_CLASS, INPUT_SIZE

    # Static, tile-aligned views into the packed slab (zero-cost).
    w16 = slab_ref[ROW_W16:ROW_W16 + H2, :]           # (2H, 2H)
    ztbl = slab_ref[ROW_ZTBL:ROW_ZTBL + V, :]         # (V, 2H)
    fcw = slab_ref[ROW_FCW:ROW_FCW + H2, 0:C]         # (2H, C)
    fcb = slab_ref[ROW_FCB:ROW_FCB + 1, 0:C]          # (1, C)

    idx = idx_ref[...]                                # (T*B, 1)

    # Fused embedding + layer-0 input projection + both bias sums via V VPU selects:
    #   z_flat[t*B+b] = [ emb[x_{b,t}] @ Wih0.T + b0  |  b1 ]
    z_flat = jnp.zeros((T * B, H2), jnp.float32)
    for v in range(V):
        z_flat = z_flat + jnp.where(idx == v, ztbl[v:v + 1, :], 0.0)

    # Skewed fused recurrence:  state = [h0_s | h1_{s-1}],
    #   state <- tanh(state @ W16 + z_s)
    # Super-step 0 has state == 0, so it reduces to tanh(z_0) with the h1 half forced
    # back to the zero initial hidden state (no matmul on the chain head).
    lane = jax.lax.broadcasted_iota(jnp.int32, (B, H2), 1)
    h0_half = (lane < H).astype(jnp.float32)          # 1 on h0 lanes, 0 on h1 lanes
    state = jnp.tanh(z_flat[0:B, :]) * h0_half        # [h0_0 | 0]

    for s in range(1, T + 1):                         # T is small & static -> unrolled
        zi = min(s, T - 1)                            # last step only needs the b1 half of z
        z = z_flat[zi * B:(zi + 1) * B, :]
        state = jnp.tanh(
            jnp.dot(state, w16, preferred_element_type=jnp.float32) + z)
        seq_ref[(s - 1) * B:s * B, :] = state         # rows for t = s-1; holds [h0_s | h1_{s-1}]

    # Final Linear hoisted out of the loop; fcw's top H rows are zero, so the h0 half
    # of each stored state contributes nothing.
    seq = seq_ref[...]                                # (T*B, 2H)
    out_ref[...] = jnp.dot(seq, fcw, preferred_element_type=jnp.float32) + fcb


def init_params(key):
    """Deterministic init mimicking PyTorch default init shapes/ranges."""
    ks = jax.random.split(key, 12)
    kr = 1.0 / math.sqrt(HIDDEN_SIZE)

    def unif(k, shape, bound):
        return jax.random.uniform(k, shape, jnp.float32, -bound, bound)

    params = {
        "emb_w": jax.random.normal(ks[0], (INPUT_SIZE, EMBEDDING_SIZE), jnp.float32),
        # RNN layer 0
        "w_ih_l0": unif(ks[1], (HIDDEN_SIZE, EMBEDDING_SIZE), kr),
        "w_hh_l0": unif(ks[2], (HIDDEN_SIZE, HIDDEN_SIZE), kr),
        "b_ih_l0": unif(ks[3], (HIDDEN_SIZE,), kr),
        "b_hh_l0": unif(ks[4], (HIDDEN_SIZE,), kr),
        # RNN layer 1
        "w_ih_l1": unif(ks[5], (HIDDEN_SIZE, HIDDEN_SIZE), kr),
        "w_hh_l1": unif(ks[6], (HIDDEN_SIZE, HIDDEN_SIZE), kr),
        "b_ih_l1": unif(ks[7], (HIDDEN_SIZE,), kr),
        "b_hh_l1": unif(ks[8], (HIDDEN_SIZE,), kr),
        # fc
        "fc_w": unif(ks[9], (NUM_CLASS, HIDDEN_SIZE), 1.0 / math.sqrt(HIDDEN_SIZE)),
        "fc_b": unif(ks[10], (NUM_CLASS,), 1.0 / math.sqrt(HIDDEN_SIZE)),
    }
    return params


def pack_param_slab(params):
    """Pack all kernel parameters into one (SLAB_ROWS, 2H) f32 slab (wrapper-side glue)."""
    H, C, V = HIDDEN_SIZE, NUM_CLASS, INPUT_SIZE
    b0 = params["b_ih_l0"] + params["b_hh_l0"]
    b1 = params["b_ih_l1"] + params["b_hh_l1"]

    # Fused embedding + layer-0 input projection table with b1 appended so the
    # kernel's per-token select yields the full (1, 2H) additive term.
    xproj_tbl = params["emb_w"] @ params["w_ih_l0"].T + b0[None, :]            # (V, H)
    ztbl = jnp.concatenate(
        [xproj_tbl, jnp.broadcast_to(b1[None, :], (V, H))], axis=1)            # (V, 2H)

    # Block-upper-triangular fused recurrence weight.
    w16 = jnp.zeros((H2, H2), jnp.float32)
    w16 = w16.at[0:H, 0:H].set(params["w_hh_l0"].T)
    w16 = w16.at[0:H, H:H2].set(params["w_ih_l1"].T)
    w16 = w16.at[H:H2, H:H2].set(params["w_hh_l1"].T)

    slab = jnp.zeros((SLAB_ROWS, H2), jnp.float32)
    slab = slab.at[ROW_W16:ROW_W16 + H2, :].set(w16)
    slab = slab.at[ROW_ZTBL:ROW_ZTBL + V, :].set(ztbl)
    slab = slab.at[ROW_FCW + H:ROW_FCW + H2, 0:C].set(params["fc_w"].T)        # top H rows stay 0
    slab = slab.at[ROW_FCB:ROW_FCB + 1, 0:C].set(params["fc_b"].reshape(1, C))
    return slab


@jax.jit
def rnn_model_forward(x_idx, params):
    """x_idx: (B, T) int32 token ids in [0, INPUT_SIZE). Returns (B*T, NUM_CLASS)."""
    B, T = x_idx.shape
    C = NUM_CLASS
    slab = pack_param_slab(params)
    # t-major (T*B, 1) id column; done in the wrapper so no in-kernel relayout.
    idx_tb = x_idx.T.reshape(T * B, 1).astype(jnp.int32)

    vmem = pl.BlockSpec(memory_space=pltpu.MemorySpace.VMEM)
    out_tb = pl.pallas_call(
        functools.partial(rnn_kernel, batch=B, seq_len=T),
        out_shape=jax.ShapeDtypeStruct((T * B, C), jnp.float32),
        in_specs=[vmem, vmem],
        out_specs=vmem,
        scratch_shapes=[pltpu.VMEM((T * B, H2), jnp.float32)],
    )(idx_tb, slab)

    # Reorder t-major -> batch-major so rows match x.view(-1, num_class).
    # TODO(synk): if B*T grows, add a grid over batch with
    # dimension_semantics=("parallel",) so v7x's second TensorCore gets work;
    # at B=2, T=8 a grid would only add per-step overhead.
    return out_tb.reshape(T, B, C).transpose(1, 0, 2).reshape(B * T, C)


def rnn_model_reference(x_idx, params):
    """Pure-JAX reference of the PyTorch forward (for a sanity check)."""
    B, T = x_idx.shape
    emb = jnp.take(params["emb_w"], x_idx, axis=0)                 # (B, T, E)
    h0 = jnp.zeros((B, HIDDEN_SIZE), jnp.float32)
    h1 = jnp.zeros((B, HIDDEN_SIZE), jnp.float32)
    outs = []
    for t in range(T):
        xt = emb[:, t, :]
        h0 = jnp.tanh(xt @ params["w_ih_l0"].T + h0 @ params["w_hh_l0"].T
                      + params["b_ih_l0"] + params["b_hh_l0"])
        h1 = jnp.tanh(h0 @ params["w_ih_l1"].T + h1 @ params["w_hh_l1"].T
                      + params["b_ih_l1"] + params["b_hh_l1"])
        outs.append(h1 @ params["fc_w"].T + params["fc_b"])
    return jnp.stack(outs, axis=1).reshape(-1, NUM_CLASS)


if __name__ == "__main__":
    key = jax.random.PRNGKey(0)
    pkey, xkey = jax.random.split(key)

    params = init_params(pkey)

    # Small example input consistent with the module: batch=2, seq=8, vocab=4.
    B, T = 2, 8
    x_idx = jax.random.randint(xkey, (B, T), 0, INPUT_SIZE, dtype=jnp.int32)

    out = rnn_model_forward(x_idx, params)
    out = jax.block_until_ready(out)

    ref = rnn_model_reference(x_idx, params)
    assert out.shape == (B * T, NUM_CLASS)
    assert jnp.allclose(out, ref, atol=1e-5, rtol=1e-5)

    print("KERNEL_OK")
</pallas_src>

<mosaic_0001>
module attributes {stable_mosaic.version = 11 : i64} {
  func.func @rnn_kernel(%arg0: memref<16x1xi32, #tpu.memory_space<vmem>>, %arg1: memref<48x16xf32, #tpu.memory_space<vmem>>, %arg2: memref<16x4xf32, #tpu.memory_space<vmem>>, %arg3: memref<16x16xf32, #tpu.memory_space<vmem>>) attributes {dimension_semantics = [], scalar_prefetch = 0 : i64, scratch_operands = 1 : i64, tpu.core_type = #tpu.core_type<tc>} {
    %c0 = arith.constant 0 : index
    %c0_0 = arith.constant 0 : index
    %0 = vector.load %arg1[%c0, %c0_0] : memref<48x16xf32, #tpu.memory_space<vmem>>, vector<16x16xf32>
    %c16 = arith.constant 16 : index
    %c0_1 = arith.constant 0 : index
    %1 = vector.load %arg1[%c16, %c0_1] : memref<48x16xf32, #tpu.memory_space<vmem>>, vector<4x16xf32>
    %c24 = arith.constant 24 : index
    %c0_2 = arith.constant 0 : index
    %2 = vector.load %arg1[%c24, %c0_2] : memref<48x16xf32, #tpu.memory_space<vmem>>, vector<16x4xf32>
    %c40 = arith.constant 40 : index
    %c0_3 = arith.constant 0 : index
    %3 = vector.load %arg1[%c40, %c0_3] : memref<48x16xf32, #tpu.memory_space<vmem>>, vector<1x4xf32>
    %c0_4 = arith.constant 0 : index
    %c0_5 = arith.constant 0 : index
    %4 = vector.load %arg0[%c0_4, %c0_5] : memref<16x1xi32, #tpu.memory_space<vmem>>, vector<16x1xi32>
    %cst = arith.constant 0.000000e+00 : f32
    %5 = vector.broadcast %cst : f32 to vector<16x16xf32>
    %c0_i32 = arith.constant 0 : i32
    %6 = vector.broadcast %c0_i32 : i32 to vector<16x1xi32>
    %7 = arith.cmpi eq, %4, %6 : vector<16x1xi32>
    %8 = vector.extract_strided_slice %1 {offsets = [0, 0], sizes = [1, 16], strides = [1, 1]} : vector<4x16xf32> to vector<1x16xf32>
    %cst_6 = arith.constant 0.000000e+00 : f32
    %9 = vector.shape_cast %7 : vector<16x1xi1> to vector<16x1xi1>
    %10 = vector.broadcast %9 : vector<16x1xi1> to vector<16x16xi1>
    %11 = vector.shape_cast %8 : vector<1x16xf32> to vector<1x16xf32>
    %12 = vector.broadcast %11 : vector<1x16xf32> to vector<16x16xf32>
    %13 = vector.broadcast %cst_6 : f32 to vector<16x16xf32>
    %14 = arith.select %10, %12, %13 : vector<16x16xi1>, vector<16x16xf32>
    %15 = arith.addf %5, %14 : vector<16x16xf32>
    %c1_i32 = arith.constant 1 : i32
    %16 = vector.broadcast %c1_i32 : i32 to vector<16x1xi32>
    %17 = arith.cmpi eq, %4, %16 : vector<16x1xi32>
    %18 = vector.extract_strided_slice %1 {offsets = [1, 0], sizes = [1, 16], strides = [1, 1]} : vector<4x16xf32> to vector<1x16xf32>
    %cst_7 = arith.constant 0.000000e+00 : f32
    %19 = vector.shape_cast %17 : vector<16x1xi1> to vector<16x1xi1>
    %20 = vector.broadcast %19 : vector<16x1xi1> to vector<16x16xi1>
    %21 = vector.shape_cast %18 : vector<1x16xf32> to vector<1x16xf32>
    %22 = vector.broadcast %21 : vector<1x16xf32> to vector<16x16xf32>
    %23 = vector.broadcast %cst_7 : f32 to vector<16x16xf32>
    %24 = arith.select %20, %22, %23 : vector<16x16xi1>, vector<16x16xf32>
    %25 = arith.addf %15, %24 : vector<16x16xf32>
    %c2_i32 = arith.constant 2 : i32
    %26 = vector.broadcast %c2_i32 : i32 to vector<16x1xi32>
    %27 = arith.cmpi eq, %4, %26 : vector<16x1xi32>
    %28 = vector.extract_strided_slice %1 {offsets = [2, 0], sizes = [1, 16], strides = [1, 1]} : vector<4x16xf32> to vector<1x16xf32>
    %cst_8 = arith.constant 0.000000e+00 : f32
    %29 = vector.shape_cast %27 : vector<16x1xi1> to vector<16x1xi1>
    %30 = vector.broadcast %29 : vector<16x1xi1> to vector<16x16xi1>
    %31 = vector.shape_cast %28 : vector<1x16xf32> to vector<1x16xf32>
    %32 = vector.broadcast %31 : vector<1x16xf32> to vector<16x16xf32>
    %33 = vector.broadcast %cst_8 : f32 to vector<16x16xf32>
    %34 = arith.select %30, %32, %33 : vector<16x16xi1>, vector<16x16xf32>
    %35 = arith.addf %25, %34 : vector<16x16xf32>
    %c3_i32 = arith.constant 3 : i32
    %36 = vector.broadcast %c3_i32 : i32 to vector<16x1xi32>
    %37 = arith.cmpi eq, %4, %36 : vector<16x1xi32>
    %38 = vector.extract_strided_slice %1 {offsets = [3, 0], sizes = [1, 16], strides = [1, 1]} : vector<4x16xf32> to vector<1x16xf32>
    %cst_9 = arith.constant 0.000000e+00 : f32
    %39 = vector.shape_cast %37 : vector<16x1xi1> to vector<16x1xi1>
    %40 = vector.broadcast %39 : vector<16x1xi1> to vector<16x16xi1>
    %41 = vector.shape_cast %38 : vector<1x16xf32> to vector<1x16xf32>
    %42 = vector.broadcast %41 : vector<1x16xf32> to vector<16x16xf32>
    %43 = vector.broadcast %cst_9 : f32 to vector<16x16xf32>
    %44 = arith.select %40, %42, %43 : vector<16x16xi1>, vector<16x16xf32>
    %45 = arith.addf %35, %44 : vector<16x16xf32>
    %46 = tpu.iota {dimensions = array<i32: 1>} : vector<2x16xi32>
    %c8_i32 = arith.constant 8 : i32
    %47 = vector.broadcast %c8_i32 : i32 to vector<2x16xi32>
    %48 = arith.cmpi slt, %46, %47 : vector<2x16xi32>
    %49 = arith.extui %48 : vector<2x16xi1> to vector<2x16xi32>
    %50 = arith.sitofp %49 : vector<2x16xi32> to vector<2x16xf32>
    %51 = vector.extract_strided_slice %45 {offsets = [0, 0], sizes = [2, 16], strides = [1, 1]} : vector<16x16xf32> to vector<2x16xf32>
    %52 = math.tanh %51 : vector<2x16xf32>
    %53 = arith.mulf %52, %50 : vector<2x16xf32>
    %54 = vector.extract_strided_slice %45 {offsets = [2, 0], sizes = [2, 16], strides = [1, 1]} : vector<16x16xf32> to vector<2x16xf32>
    %cst_10 = arith.constant dense<0.000000e+00> : vector<2x16xf32>
    %55 = tpu.matmul %53, %0, %cst_10 {dimension_numbers = #tpu.dot_dimension_numbers<[1], [0], [0], [1], [0, 0, 1, 1], [], []>} : vector<2x16xf32>, vector<16x16xf32>, vector<2x16xf32> -> vector<2x16xf32>
    %56 = arith.addf %55, %54 : vector<2x16xf32>
    %57 = math.tanh %56 : vector<2x16xf32>
    %c0_11 = arith.constant 0 : index
    %c0_12 = arith.constant 0 : index
    %58 = vector.load %arg3[%c0_11, %c0_12] : memref<16x16xf32, #tpu.memory_space<vmem>>, vector<2x16xf32>
    tpu.vector_store %arg3[%c0_11, %c0_12], %57 {strides = array<i32>} : memref<16x16xf32, #tpu.memory_space<vmem>>, vector<2x16xf32>,
    %59 = vector.extract_strided_slice %45 {offsets = [4, 0], sizes = [2, 16], strides = [1, 1]} : vector<16x16xf32> to vector<2x16xf32>
    %cst_13 = arith.constant dense<0.000000e+00> : vector<2x16xf32>
    %60 = tpu.matmul %57, %0, %cst_13 {dimension_numbers = #tpu.dot_dimension_numbers<[1], [0], [0], [1], [0, 0, 1, 1], [], []>} : vector<2x16xf32>, vector<16x16xf32>, vector<2x16xf32> -> vector<2x16xf32>
    %61 = arith.addf %60, %59 : vector<2x16xf32>
    %62 = math.tanh %61 : vector<2x16xf32>
    %c2 = arith.constant 2 : index
    %c0_14 = arith.constant 0 : index
    %63 = vector.load %arg3[%c2, %c0_14] : memref<16x16xf32, #tpu.memory_space<vmem>>, vector<2x16xf32>
    tpu.vector_store %arg3[%c2, %c0_14], %62 {strides = array<i32>} : memref<16x16xf32, #tpu.memory_space<vmem>>, vector<2x16xf32>,
    %64 = vector.extract_strided_slice %45 {offsets = [6, 0], sizes = [2, 16], strides = [1, 1]} : vector<16x16xf32> to vector<2x16xf32>
    %cst_15 = arith.constant dense<0.000000e+00> : vector<2x16xf32>
    %65 = tpu.matmul %62, %0, %cst_15 {dimension_numbers = #tpu.dot_dimension_numbers<[1], [0], [0], [1], [0, 0, 1, 1], [], []>} : vector<2x16xf32>, vector<16x16xf32>, vector<2x16xf32> -> vector<2x16xf32>
    %66 = arith.addf %65, %64 : vector<2x16xf32>
    %67 = math.tanh %66 : vector<2x16xf32>
    %c4 = arith.constant 4 : index
    %c0_16 = arith.constant 0 : index
    %68 = vector.load %arg3[%c4, %c0_16] : memref<16x16xf32, #tpu.memory_space<vmem>>, vector<2x16xf32>
    tpu.vector_store %arg3[%c4, %c0_16], %67 {strides = array<i32>} : memref<16x16xf32, #tpu.memory_space<vmem>>, vector<2x16xf32>,
    %69 = vector.extract_strided_slice %45 {offsets = [8, 0], sizes = [2, 16], strides = [1, 1]} : vector<16x16xf32> to vector<2x16xf32>
    %cst_17 = arith.constant dense<0.000000e+00> : vector<2x16xf32>
    %70 = tpu.matmul %67, %0, %cst_17 {dimension_numbers = #tpu.dot_dimension_numbers<[1], [0], [0], [1], [0, 0, 1, 1], [], []>} : vector<2x16xf32>, vector<16x16xf32>, vector<2x16xf32> -> vector<2x16xf32>
    %71 = arith.addf %70, %69 : vector<2x16xf32>
    %72 = math.tanh %71 : vector<2x16xf32>
    %c6 = arith.constant 6 : index
    %c0_18 = arith.constant 0 : index
    %73 = vector.load %arg3[%c6, %c0_18] : memref<16x16xf32, #tpu.memory_space<vmem>>, vector<2x16xf32>
    tpu.vector_store %arg3[%c6, %c0_18], %72 {strides = array<i32>} : memref<16x16xf32, #tpu.memory_space<vmem>>, vector<2x16xf32>,
    %74 = vector.extract_strided_slice %45 {offsets = [10, 0], sizes = [2, 16], strides = [1, 1]} : vector<16x16xf32> to vector<2x16xf32>
    %cst_19 = arith.constant dense<0.000000e+00> : vector<2x16xf32>
    %75 = tpu.matmul %72, %0, %cst_19 {dimension_numbers = #tpu.dot_dimension_numbers<[1], [0], [0], [1], [0, 0, 1, 1], [], []>} : vector<2x16xf32>, vector<16x16xf32>, vector<2x16xf32> -> vector<2x16xf32>
    %76 = arith.addf %75, %74 : vector<2x16xf32>
    %77 = math.tanh %76 : vector<2x16xf32>
    %c8 = arith.constant 8 : index
    %c0_20 = arith.constant 0 : index
    %78 = vector.load %arg3[%c8, %c0_20] : memref<16x16xf32, #tpu.memory_space<vmem>>, vector<2x16xf32>
    tpu.vector_store %arg3[%c8, %c0_20], %77 {strides = array<i32>} : memref<16x16xf32, #tpu.memory_space<vmem>>, vector<2x16xf32>,
    %79 = vector.extract_strided_slice %45 {offsets = [12, 0], sizes = [2, 16], strides = [1, 1]} : vector<16x16xf32> to vector<2x16xf32>
    %cst_21 = arith.constant dense<0.000000e+00> : vector<2x16xf32>
    %80 = tpu.matmul %77, %0, %cst_21 {dimension_numbers = #tpu.dot_dimension_numbers<[1], [0], [0], [1], [0, 0, 1, 1], [], []>} : vector<2x16xf32>, vector<16x16xf32>, vector<2x16xf32> -> vector<2x16xf32>
    %81 = arith.addf %80, %79 : vector<2x16xf32>
    %82 = math.tanh %81 : vector<2x16xf32>
    %c10 = arith.constant 10 : index
    %c0_22 = arith.constant 0 : index
    %83 = vector.load %arg3[%c10, %c0_22] : memref<16x16xf32, #tpu.memory_space<vmem>>, vector<2x16xf32>
    tpu.vector_store %arg3[%c10, %c0_22], %82 {strides = array<i32>} : memref<16x16xf32, #tpu.memory_space<vmem>>, vector<2x16xf32>,
    %84 = vector.extract_strided_slice %45 {offsets = [14, 0], sizes = [2, 16], strides = [1, 1]} : vector<16x16xf32> to vector<2x16xf32>
    %cst_23 = arith.constant dense<0.000000e+00> : vector<2x16xf32>
    %85 = tpu.matmul %82, %0, %cst_23 {dimension_numbers = #tpu.dot_dimension_numbers<[1], [0], [0], [1], [0, 0, 1, 1], [], []>} : vector<2x16xf32>, vector<16x16xf32>, vector<2x16xf32> -> vector<2x16xf32>
    %86 = arith.addf %85, %84 : vector<2x16xf32>
    %87 = math.tanh %86 : vector<2x16xf32>
    %c12 = arith.constant 12 : index
    %c0_24 = arith.constant 0 : index
    %88 = vector.load %arg3[%c12, %c0_24] : memref<16x16xf32, #tpu.memory_space<vmem>>, vector<2x16xf32>
    tpu.vector_store %arg3[%c12, %c0_24], %87 {strides = array<i32>} : memref<16x16xf32, #tpu.memory_space<vmem>>, vector<2x16xf32>,
    %89 = vector.extract_strided_slice %45 {offsets = [14, 0], sizes = [2, 16], strides = [1, 1]} : vector<16x16xf32> to vector<2x16xf32>
    %cst_25 = arith.constant dense<0.000000e+00> : vector<2x16xf32>
    %90 = tpu.matmul %87, %0, %cst_25 {dimension_numbers = #tpu.dot_dimension_numbers<[1], [0], [0], [1], [0, 0, 1, 1], [], []>} : vector<2x16xf32>, vector<16x16xf32>, vector<2x16xf32> -> vector<2x16xf32>
    %91 = arith.addf %90, %89 : vector<2x16xf32>
    %92 = math.tanh %91 : vector<2x16xf32>
    %c14 = arith.constant 14 : index
    %c0_26 = arith.constant 0 : index
    %93 = vector.load %arg3[%c14, %c0_26] : memref<16x16xf32, #tpu.memory_space<vmem>>, vector<2x16xf32>
    tpu.vector_store %arg3[%c14, %c0_26], %92 {strides = array<i32>} : memref<16x16xf32, #tpu.memory_space<vmem>>, vector<2x16xf32>,
    %c0_27 = arith.constant 0 : index
    %c0_28 = arith.constant 0 : index
    %94 = vector.load %arg3[%c0_27, %c0_28] : memref<16x16xf32, #tpu.memory_space<vmem>>, vector<16x16xf32>
    %cst_29 = arith.constant dense<0.000000e+00> : vector<16x4xf32>
    %95 = tpu.matmul %94, %2, %cst_29 {dimension_numbers = #tpu.dot_dimension_numbers<[1], [0], [0], [1], [0, 0, 1, 1], [], []>} : vector<16x16xf32>, vector<16x4xf32>, vector<16x4xf32> -> vector<16x4xf32>
    %96 = vector.broadcast %3 : vector<1x4xf32> to vector<16x4xf32>
    %97 = arith.addf %95, %96 : vector<16x4xf32>
    %c0_30 = arith.constant 0 : index
    %c0_31 = arith.constant 0 : index
    %98 = vector.load %arg2[%c0_30, %c0_31] : memref<16x4xf32, #tpu.memory_space<vmem>>, vector<16x4xf32>
    tpu.vector_store %arg2[%c0_30, %c0_31], %97 {strides = array<i32>} : memref<16x4xf32, #tpu.memory_space<vmem>>, vector<16x4xf32>,
    return
  }
}

</mosaic_0001>

<llo_original>
// kernel: rnn_model_forward.1
$region0: #{rnn_model_forward.1}
  #allocation0 [shape = 'u32[]', space=smem, size = 0x4, offset = 0x4, fixed_abs, tag = 'smem constant byte address 0x4 - core index']
  #allocation1 [shape = 'u32[72,128]{1,0:T(1,128)}', space=vmem, size = 0x9000, scoped, tag = 'internal scratch']
  #allocation2 [shape = 'f32[16,16]{1,0:T(8,128)}', space=vmem, size = 0x2000, scoped, tag = 'scratch operand']
  %s0 = inlined_call_operand.vmem [shape: s32[16,1], index: 0, kind: input, shape index: {}]
  %s1 = inlined_call_operand.vmem [shape: f32[48,16], index: 1, kind: input, shape index: {}]
  %s2 = inlined_call_operand.vmem [shape: f32[16,4], index: 2, kind: output, shape index: {}]
  %s3 = sld [smem:[#allocation0]]
  $region18: #{rnn_model_forward.1} parent=0
    _
  %s5 = ssub.s32 1, %s3
  %s6 = scalar_select 0, %s5, %s3
  // Predicated region
  $region2: #{rnn_model_forward.1} parent=0 // pred_check
    _
  $region3: #{rnn_model_forward.1} parent=0 // pred_check_branch
    %8 = sbr.rel (0) target = $region5
  $region4: #{rnn_model_forward.1} parent=0 // pred_region
    _
  $region5: #{rnn_model_forward.1} parent=0 // pred_fallthru
    _
  // Predicated region
  $region6: #{rnn_model_forward.1} parent=0 // pred_check
    _
  $region7: #{rnn_model_forward.1} parent=0 // pred_check_branch
    %10 = sbr.rel (0) target = $region9
  $region8: #{rnn_model_forward.1} parent=0 // pred_region
    _
  $region9: #{rnn_model_forward.1} parent=0 // pred_fallthru
    _
  %v11 = vld [vmem:[%s1] sm:$0xff]
  %v12 = vld [vmem:[%s1 + $0x8] sm:$0xff]
  %v13 = vld [vmem:[%s1 + $0x10] sm:$0xf]
  %v14 = vld [vmem:[%s1 + $0x18] sm:$0xff]
  %v15 = vld [vmem:[%s1 + $0x20] sm:$0xff]
  %v16 = vld [vmem:[%s1 + $0x28] sm:$0x1]
  %v17 = vld [vmem:[%s0] sm:$0xff]
  %v18 = vld [vmem:[%s0 + $0x8] sm:$0xff]
  %vm19 = vcmp.eq.s32.totalorder %v17, 0
  %vm20 = vcmp.eq.s32.totalorder %v18, 0
  %v21 = vsel %vm19, 1, 0
  %v22 = vsel %vm20, 1, 0
  %23 = vset.pattern.permute.xlu0 0
  %24 = vperm.xlu0 %23, %v21
  %v25 = vpop.permute.xlu0 %24
  %26 = vset.pattern.permute.xlu0 0
  %27 = vperm.xlu0 %26, %v22
  %v28 = vpop.permute.xlu0 %27
  %vm29 = vcmp.eq.s32.totalorder %v25, 1
  %vm30 = vcmp.eq.s32.totalorder %v28, 1
  %v31 = vperm.slane %v13, 0
  %v32 = vsel %vm29, %v31, 0.0
  %v33 = vsel %vm30, %v31, 0.0
  %v34 = vadd.f32 %v32, 0.0
  %v35 = vadd.f32 %v33, 0.0
  %vm36 = vcmp.eq.s32.totalorder %v17, 1
  %vm37 = vcmp.eq.s32.totalorder %v18, 1
  %v38 = vsel %vm36, 1, 0
  %v39 = vsel %vm37, 1, 0
  %40 = vset.pattern.permute.xlu0 0
  %41 = vperm.xlu0 %40, %v38
  %v42 = vpop.permute.xlu0 %41
  %43 = vset.pattern.permute.xlu0 0
  %44 = vperm.xlu0 %43, %v39
  %v45 = vpop.permute.xlu0 %44
  %vm46 = vcmp.eq.s32.totalorder %v42, 1
  %vm47 = vcmp.eq.s32.totalorder %v45, 1
  %v48 = vperm.slane %v13, 1
  %v49 = vsel %vm46, %v48, 0.0
  %v50 = vsel %vm47, %v48, 0.0
  %v51 = vadd.f32 %v34, %v49
  %v52 = vadd.f32 %v35, %v50
  %vm53 = vcmp.eq.s32.totalorder %v17, 2
  %vm54 = vcmp.eq.s32.totalorder %v18, 2
  %v55 = vsel %vm53, 1, 0
  %v56 = vsel %vm54, 1, 0
  %57 = vset.pattern.permute.xlu0 0
  %58 = vperm.xlu0 %57, %v55
  %v59 = vpop.permute.xlu0 %58
  %60 = vset.pattern.permute.xlu0 0
  %61 = vperm.xlu0 %60, %v56
  %v62 = vpop.permute.xlu0 %61
  %vm63 = vcmp.eq.s32.totalorder %v59, 1
  %vm64 = vcmp.eq.s32.totalorder %v62, 1
  %v65 = vperm.slane %v13, 2
  %v66 = vsel %vm63, %v65, 0.0
  %v67 = vsel %vm64, %v65, 0.0
  %v68 = vadd.f32 %v51, %v66
  %v69 = vadd.f32 %v52, %v67
  %vm70 = vcmp.eq.s32.totalorder %v17, 3
  %vm71 = vcmp.eq.s32.totalorder %v18, 3
  %v72 = vsel %vm70, 1, 0
  %v73 = vsel %vm71, 1, 0
  %74 = vset.pattern.permute.xlu0 0
  %75 = vperm.xlu0 %74, %v72
  %v76 = vpop.permute.xlu0 %75
  %77 = vset.pattern.permute.xlu0 0
  %78 = vperm.xlu0 %77, %v73
  %v79 = vpop.permute.xlu0 %78
  %vm80 = vcmp.eq.s32.totalorder %v76, 1
  %vm81 = vcmp.eq.s32.totalorder %v79, 1
  %v82 = vperm.slane %v13, 3
  %v83 = vsel %vm80, %v82, 0.0
  %v84 = vsel %vm81, %v82, 0.0
  %v85 = vadd.f32 %v68, %v83
  %v86 = vadd.f32 %v69, %v84
  %v87 = vlaneseq
  %v88 = vand.u32 %v87, 127
  %vm89 = vcmp.lt.s32.totalorder %v88, 8
  %v90 = vsel %vm89, 1, 0
  %v91 = vcvt.s32.f32 %v90
  %v92 = vtanh.pop %v85
  %v93 = vmul.f32 %v92, %v91
  %v95 = vrot.slane %v85, 2
  %vm97 = vcmask 130048
  %v99 = vsel %vm97, %v93, 0
  %101 = vmatpush.msra.mxu0 0.0
  %102 = vmatpush.msra.mxu0 0.0
  %103 = vmatpush.msra.mxu0 0.0
  %104 = vmatpush.msra.mxu0 0.0
  %105 = vmatpush.msra.mxu0 0.0
  %106 = vmatpush.msra.mxu0 0.0
  %107 = vmatpush.msra.mxu0 0.0
  %108 = vmatpush.msra.mxu0 0.0
  %109 = vmatpush.msra.mxu0 0.0
  %110 = vmatpush.msra.mxu0 0.0
  %111 = vmatpush.msra.mxu0 0.0
  %112 = vmatpush.msra.mxu0 0.0
  %113 = vmatpush.msra.mxu0 0.0
  %114 = vmatpush.msra.mxu0 0.0
  %115 = vmatpush.msra.mxu0 %v12
  %116 = vmatpush.msra.mxu0 %v11
  %117 = vmatmul.f32.gmra.mxu0 %v99
  %v118 = vpop.f32.mrf.mxu0
  %v119 = vadd.f32 %v95, %v118
  %120 = vdwg.mxu0
  %v121 = vtanh.pop %v119
  %vm122 = vcmask 123904
  %123 = vst.msk [vmem:[#allocation2] sm:$0x3] %vm122, %v121
  %v124 = vrot.slane %v85, 4
  %v127 = vsel %vm97, %v121, 0
  %129 = vmatpush.msra.mxu0 0.0
  %130 = vmatpush.msra.mxu0 0.0
  %131 = vmatpush.msra.mxu0 0.0
  %132 = vmatpush.msra.mxu0 0.0
  %133 = vmatpush.msra.mxu0 0.0
  %134 = vmatpush.msra.mxu0 0.0
  %135 = vmatpush.msra.mxu0 0.0
  %136 = vmatpush.msra.mxu0 0.0
  %137 = vmatpush.msra.mxu0 0.0
  %138 = vmatpush.msra.mxu0 0.0
  %139 = vmatpush.msra.mxu0 0.0
  %140 = vmatpush.msra.mxu0 0.0
  %141 = vmatpush.msra.mxu0 0.0
  %142 = vmatpush.msra.mxu0 0.0
  %143 = vmatpush.msra.mxu0 %v12
  %144 = vmatpush.msra.mxu0 %v11
  %145 = vmatmul.f32.gmra.mxu0 %v127
  %v146 = vpop.f32.mrf.mxu0
  %v147 = vadd.f32 %v124, %v146
  %148 = vdwg.mxu0
  %v149 = vtanh.pop %v147
  %150 = vst.msk [vmem:[#allocation2 + $0x2] sm:$0x3] %vm122, %v149
  %v151 = vrot.slane %v85, 6
  %v154 = vsel %vm97, %v149, 0
  %156 = vmatpush.msra.mxu0 0.0
  %157 = vmatpush.msra.mxu0 0.0
  %158 = vmatpush.msra.mxu0 0.0
  %159 = vmatpush.msra.mxu0 0.0
  %160 = vmatpush.msra.mxu0 0.0
  %161 = vmatpush.msra.mxu0 0.0
  %162 = vmatpush.msra.mxu0 0.0
  %163 = vmatpush.msra.mxu0 0.0
  %164 = vmatpush.msra.mxu0 0.0
  %165 = vmatpush.msra.mxu0 0.0
  %166 = vmatpush.msra.mxu0 0.0
  %167 = vmatpush.msra.mxu0 0.0
  %168 = vmatpush.msra.mxu0 0.0
  %169 = vmatpush.msra.mxu0 0.0
  %170 = vmatpush.msra.mxu0 %v12
  %171 = vmatpush.msra.mxu0 %v11
  %172 = vmatmul.f32.gmra.mxu0 %v154
  %v173 = vpop.f32.mrf.mxu0
  %v174 = vadd.f32 %v151, %v173
  %175 = vdwg.mxu0
  %v176 = vtanh.pop %v174
  %177 = vst.msk [vmem:[#allocation2 + $0x4] sm:$0x3] %vm122, %v176
  %v179 = vsel %vm97, %v176, 0
  %181 = vmatpush.msra.mxu0 0.0
  %182 = vmatpush.msra.mxu0 0.0
  %183 = vmatpush.msra.mxu0 0.0
  %184 = vmatpush.msra.mxu0 0.0
  %185 = vmatpush.msra.mxu0 0.0
  %186 = vmatpush.msra.mxu0 0.0
  %187 = vmatpush.msra.mxu0 0.0
  %188 = vmatpush.msra.mxu0 0.0
  %189 = vmatpush.msra.mxu0 0.0
  %190 = vmatpush.msra.mxu0 0.0
  %191 = vmatpush.msra.mxu0 0.0
  %192 = vmatpush.msra.mxu0 0.0
  %193 = vmatpush.msra.mxu0 0.0
  %194 = vmatpush.msra.mxu0 0.0
  %195 = vmatpush.msra.mxu0 %v12
  %196 = vmatpush.msra.mxu0 %v11
  %197 = vmatmul.f32.gmra.mxu0 %v179
  %v198 = vpop.f32.mrf.mxu0
  %v199 = vadd.f32 %v86, %v198
  %200 = vdwg.mxu0
  %v201 = vtanh.pop %v199
  %202 = vst.msk [vmem:[#allocation2 + $0x6] sm:$0x3] %vm122, %v201
  %v204 = vrot.slane %v86, 2
  %v207 = vsel %vm97, %v201, 0
  %209 = vmatpush.msra.mxu0 0.0
  %210 = vmatpush.msra.mxu0 0.0
  %211 = vmatpush.msra.mxu0 0.0
  %212 = vmatpush.msra.mxu0 0.0
  %213 = vmatpush.msra.mxu0 0.0
  %214 = vmatpush.msra.mxu0 0.0
  %215 = vmatpush.msra.mxu0 0.0
  %216 = vmatpush.msra.mxu0 0.0
  %217 = vmatpush.msra.mxu0 0.0
  %218 = vmatpush.msra.mxu0 0.0
  %219 = vmatpush.msra.mxu0 0.0
  %220 = vmatpush.msra.mxu0 0.0
  %221 = vmatpush.msra.mxu0 0.0
  %222 = vmatpush.msra.mxu0 0.0
  %223 = vmatpush.msra.mxu0 %v12
  %224 = vmatpush.msra.mxu0 %v11
  %225 = vmatmul.f32.gmra.mxu0 %v207
  %v226 = vpop.f32.mrf.mxu0
  %v227 = vadd.f32 %v204, %v226
  %228 = vdwg.mxu0
  %v229 = vtanh.pop %v227
  %230 = vst.msk [vmem:[#allocation2 + $0x8] sm:$0x3] %vm122, %v229
  %v231 = vrot.slane %v86, 4
  %v234 = vsel %vm97, %v229, 0
  %236 = vmatpush.msra.mxu0 0.0
  %237 = vmatpush.msra.mxu0 0.0
  %238 = vmatpush.msra.mxu0 0.0
  %239 = vmatpush.msra.mxu0 0.0
  %240 = vmatpush.msra.mxu0 0.0
  %241 = vmatpush.msra.mxu0 0.0
  %242 = vmatpush.msra.mxu0 0.0
  %243 = vmatpush.msra.mxu0 0.0
  %244 = vmatpush.msra.mxu0 0.0
  %245 = vmatpush.msra.mxu0 0.0
  %246 = vmatpush.msra.mxu0 0.0
  %247 = vmatpush.msra.mxu0 0.0
  %248 = vmatpush.msra.mxu0 0.0
  %249 = vmatpush.msra.mxu0 0.0
  %250 = vmatpush.msra.mxu0 %v12
  %251 = vmatpush.msra.mxu0 %v11
  %252 = vmatmul.f32.gmra.mxu0 %v234
  %v253 = vpop.f32.mrf.mxu0
  %v254 = vadd.f32 %v231, %v253
  %255 = vdwg.mxu0
  %v256 = vtanh.pop %v254
  %257 = vst.msk [vmem:[#allocation2 + $0xa] sm:$0x3] %vm122, %v256
  %v258 = vrot.slane %v86, 6
  %v261 = vsel %vm97, %v256, 0
  %263 = vmatpush.msra.mxu0 0.0
  %264 = vmatpush.msra.mxu0 0.0
  %265 = vmatpush.msra.mxu0 0.0
  %266 = vmatpush.msra.mxu0 0.0
  %267 = vmatpush.msra.mxu0 0.0
  %268 = vmatpush.msra.mxu0 0.0
  %269 = vmatpush.msra.mxu0 0.0
  %270 = vmatpush.msra.mxu0 0.0
  %271 = vmatpush.msra.mxu0 0.0
  %272 = vmatpush.msra.mxu0 0.0
  %273 = vmatpush.msra.mxu0 0.0
  %274 = vmatpush.msra.mxu0 0.0
  %275 = vmatpush.msra.mxu0 0.0
  %276 = vmatpush.msra.mxu0 0.0
  %277 = vmatpush.msra.mxu0 %v12
  %278 = vmatpush.msra.mxu0 %v11
  %279 = vmatmul.f32.gmra.mxu0 %v261
  %v280 = vpop.f32.mrf.mxu0
  %v281 = vadd.f32 %v258, %v280
  %282 = vdwg.mxu0
  %v283 = vtanh.pop %v281
  %284 = vst.msk [vmem:[#allocation2 + $0xc] sm:$0x3] %vm122, %v283
  %v286 = vsel %vm97, %v283, 0
  %288 = vmatpush.msra.mxu0 0.0
  %289 = vmatpush.msra.mxu0 0.0
  %290 = vmatpush.msra.mxu0 0.0
  %291 = vmatpush.msra.mxu0 0.0
  %292 = vmatpush.msra.mxu0 0.0
  %293 = vmatpush.msra.mxu0 0.0
  %294 = vmatpush.msra.mxu0 0.0
  %295 = vmatpush.msra.mxu0 0.0
  %296 = vmatpush.msra.mxu0 0.0
  %297 = vmatpush.msra.mxu0 0.0
  %298 = vmatpush.msra.mxu0 0.0
  %299 = vmatpush.msra.mxu0 0.0
  %300 = vmatpush.msra.mxu0 0.0
  %301 = vmatpush.msra.mxu0 0.0
  %302 = vmatpush.msra.mxu0 %v12
  %303 = vmatpush.msra.mxu0 %v11
  %304 = vmatmul.f32.gmra.mxu0 %v286
  %v305 = vpop.f32.mrf.mxu0
  %v306 = vadd.f32 %v258, %v305
  %307 = vdwg.mxu0
  %v308 = vtanh.pop %v306
  %309 = vst.msk [vmem:[#allocation2 + $0xe] sm:$0x3] %vm122, %v308
  %v310 = vld [vmem:[#allocation2] sm:$0xff]
  %v311 = vld [vmem:[#allocation2 + $0x8] sm:$0xff]
  %v312 = vperm.slane %v16, 0
  %v314 = vsel %vm97, %v310, 0
  %v317 = vsel %vm97, %v311, 0
  %319 = vmatpush.msra.mxu0 0.0
  %320 = vmatpush.msra.mxu0 0.0
  %321 = vmatpush.msra.mxu0 0.0
  %322 = vmatpush.msra.mxu0 0.0
  %323 = vmatpush.msra.mxu0 0.0
  %324 = vmatpush.msra.mxu0 0.0
  %325 = vmatpush.msra.mxu0 0.0
  %326 = vmatpush.msra.mxu0 0.0
  %327 = vmatpush.msra.mxu0 0.0
  %328 = vmatpush.msra.mxu0 0.0
  %329 = vmatpush.msra.mxu0 0.0
  %330 = vmatpush.msra.mxu0 0.0
  %331 = vmatpush.msra.mxu0 0.0
  %332 = vmatpush.msra.mxu0 0.0
  %333 = vmatpush.msra.mxu0 %v15
  %334 = vmatpush.msra.mxu0 %v14
  %335 = vmatmul.f32.gmra.mxu0 %v314
  %v336 = vpop.f32.mrf.mxu0
  %v337 = vadd.f32 %v312, %v336
  %338 = vmatmul.f32.gmra.mxu0 %v317
  %v339 = vpop.f32.mrf.mxu0
  %v340 = vadd.f32 %v312, %v339
  %341 = vdwg.mxu0
  %vm342 = vcmask 31744
  %343 = vst.msk [vmem:[%s2] sm:$0xff] %vm342, %v337
  %344 = vst.msk [vmem:[%s2 + $0x8] sm:$0xff] %vm342, %v340
  // Predicated region
  $region10: #{rnn_model_forward.1} parent=0 // pred_check
    _
  $region11: #{rnn_model_forward.1} parent=0 // pred_check_branch
    %346 = sbr.rel (0) target = $region13
  $region12: #{rnn_model_forward.1} parent=0 // pred_region
    _
  $region13: #{rnn_model_forward.1} parent=0 // pred_fallthru
    _
  // Predicated region
  $region14: #{rnn_model_forward.1} parent=0 // pred_check
    _
  $region15: #{rnn_model_forward.1} parent=0 // pred_check_branch
    %348 = sbr.rel (0) target = $region17
  $region16: #{rnn_model_forward.1} parent=0 // pred_region
    _
  $region17: #{rnn_model_forward.1} parent=0 // pred_fallthru
    _

</llo_original>
